<compile_context>
chip_gen: v7x
topology: tpu7x:2x2x1
jax: 0.10.0
libtpu: 0.0.40
codegen_flags: <defaults>
</compile_context>

<pallas_src>
import jax
import jax.numpy as jnp
from jax.experimental import pallas as pl


# ----------------------------------------------------------------------------
# Fused kernel: im2col conv + folded BN + global-avg-pool (as matmul) + fc.
# ----------------------------------------------------------------------------
def bin_gate_fused_kernel(col_ref, w_ref, scale_ref, shift_ref,
                          pool_ref, fcw_ref, fcb_ref, o_ref):
    # col_ref:   (B*H*W, 9*Cin)   im2col patches (batch folded into M)
    # w_ref:     (9*Cin, Cout)    conv weights, rows ordered (ky, kx, cin)
    # scale_ref: (1, Cout)        gamma / sqrt(var + eps)
    # shift_ref: (1, Cout)        beta + (bias - mean) * scale
    # pool_ref:  (B, B*H*W)       block-diagonal 1/(H*W) pooling matrix
    # fcw_ref:   (Cout, n_classes)
    # fcb_ref:   (1, n_classes)
    # o_ref:     (B, n_classes)

    # 3x3 conv as a single K=9*Cin MXU matmul, f32 accumulation.
    y = jnp.dot(col_ref[...], w_ref[...], preferred_element_type=jnp.float32)
    y = y * scale_ref[...] + shift_ref[...]          # folded BN (eval mode)

    # TODO(synk): DAGLayer definition not provided; dag_layers treated as identity.

    # Global average pool on the MXU (1/(H*W) folded into pool_ref), then fc.
    pooled = jnp.dot(pool_ref[...], y, preferred_element_type=jnp.float32)
    o_ref[...] = (jnp.dot(pooled, fcw_ref[...],
                          preferred_element_type=jnp.float32) + fcb_ref[...])


# ----------------------------------------------------------------------------
# Wrapper glue.
# ----------------------------------------------------------------------------
def _im2col_3x3(x_nhwc):
    """(B, H, W, Cin) -> (B*H*W, 9*Cin) patches for a 3x3 / stride 1 / pad 1 conv.

    XLA fuses the pad + 9 slices + concat into one fusion; at these sizes this
    is cheaper than an in-kernel halo, and the kernel stays pure 2-D matmul.
    """
    B, H, W, Cin = x_nhwc.shape
    xp = jnp.pad(x_nhwc, ((0, 0), (1, 1), (1, 1), (0, 0)))
    taps = [xp[:, dy:dy + H, dx:dx + W, :]
            for dy in range(3) for dx in range(3)]
    return jnp.concatenate(taps, axis=-1).reshape(B * H * W, 9 * Cin)


def bin_gate_net_forward(x_nchw, params):
    x = jnp.transpose(x_nchw, (0, 2, 3, 1)).astype(jnp.float32)   # NCHW -> NHWC
    B, H, W, Cin = x.shape
    col = _im2col_3x3(x)                                          # (B*H*W, 9*Cin)

    w = params["conv_w_mat"]                                      # (9*Cin, Cout)
    Cout = w.shape[-1]
    n_classes = params["fc_b"].shape[-1]
    M = B * H * W

    # Block-diagonal average-pooling matrix (constant-folded under jit).
    pool_mat = jnp.repeat(jnp.eye(B, dtype=jnp.float32), H * W, axis=1) / float(H * W)

    flops = (2 * M * (9 * Cin) * Cout          # conv matmul
             + 2 * B * M * Cout                # pooling matmul
             + 2 * B * Cout * n_classes)       # fc matmul
    bytes_accessed = 4 * (col.size + w.size + 2 * Cout + B * M
                          + Cout * n_classes + n_classes + B * n_classes)

    return pl.pallas_call(
        bin_gate_fused_kernel,
        out_shape=jax.ShapeDtypeStruct((B, n_classes), jnp.float32),
        in_specs=[
            pl.BlockSpec((M, 9 * Cin), lambda: (0, 0)),
            pl.BlockSpec((9 * Cin, Cout), lambda: (0, 0)),
            pl.BlockSpec((1, Cout), lambda: (0, 0)),
            pl.BlockSpec((1, Cout), lambda: (0, 0)),
            pl.BlockSpec((B, M), lambda: (0, 0)),
            pl.BlockSpec((Cout, n_classes), lambda: (0, 0)),
            pl.BlockSpec((1, n_classes), lambda: (0, 0)),
        ],
        out_specs=pl.BlockSpec((B, n_classes), lambda: (0, 0)),
        cost_estimate=pl.CostEstimate(flops=flops, transcendentals=0,
                                      bytes_accessed=bytes_accessed),
    )(col, w, params["bn_scale"], params["bn_shift"],
      pool_mat, params["fc_wt"], params["fc_b"])


def init_params(key, chn_in, chn_cur, n_classes):
    k0, k1, k2, k3, k4 = jax.random.split(key, 5)
    conv_w = 0.1 * jax.random.normal(k0, (3, 3, chn_in, chn_cur), jnp.float32)
    conv_b = 0.1 * jax.random.normal(k1, (chn_cur,), jnp.float32)
    # BatchNorm2d (eval-mode) parameters, deterministic; folded into scale/shift.
    gamma = 1.0 + 0.05 * jax.random.normal(k2, (chn_cur,), jnp.float32)
    beta = 0.05 * jax.random.normal(k3, (chn_cur,), jnp.float32)
    running_mean = jnp.zeros((chn_cur,), jnp.float32)
    running_var = jnp.ones((chn_cur,), jnp.float32)
    eps = 1e-5
    scale = gamma / jnp.sqrt(running_var + eps)
    shift = beta + (conv_b - running_mean) * scale
    # fc: Linear(chn_out, n_classes); chn_out == chn_cur since DAG layers are identity.
    fc_w = 0.1 * jax.random.normal(k4, (n_classes, chn_cur), jnp.float32)
    fc_b = jnp.zeros((n_classes,), jnp.float32)
    return {
        # (3,3,Cin,Cout) -> (9*Cin, Cout); row order (ky, kx, cin) matches im2col.
        "conv_w_mat": conv_w.reshape(9 * chn_in, chn_cur),
        "bn_scale": scale.reshape(1, chn_cur),
        "bn_shift": shift.reshape(1, chn_cur),
        "fc_wt": fc_w.T,                       # (chn_cur, n_classes)
        "fc_b": fc_b.reshape(1, n_classes),
    }


if __name__ == "__main__":
    # config: channel_in=4, channel_init=8, channel_multiplier=2 -> chn_cur=16,
    #         classes=10, groups=1 (DAG layers identity), input 2x4x16x16 (NCHW).
    B, CHN_IN, H, W = 2, 4, 16, 16
    CHN_INIT, CHN_MULT, N_CLASSES = 8, 2, 10
    chn_cur = CHN_INIT * CHN_MULT

    key = jax.random.PRNGKey(0)
    kx, kp = jax.random.split(key)
    x = jax.random.normal(kx, (B, CHN_IN, H, W), jnp.float32)     # NCHW like PyTorch
    params = init_params(kp, CHN_IN, chn_cur, N_CLASSES)

    fwd = jax.jit(bin_gate_net_forward)
    logits = fwd(x, params)
    jax.block_until_ready(logits)
    assert logits.shape == (B, N_CLASSES)
    print("KERNEL_OK")
</pallas_src>

<mosaic_0001>
module attributes {stable_mosaic.version = 11 : i64} {
  func.func @bin_gate_fused_kernel(%arg0: memref<512x36xf32, #tpu.memory_space<vmem>>, %arg1: memref<36x16xf32, #tpu.memory_space<vmem>>, %arg2: memref<1x16xf32, #tpu.memory_space<vmem>>, %arg3: memref<1x16xf32, #tpu.memory_space<vmem>>, %arg4: memref<2x512xf32, #tpu.memory_space<vmem>>, %arg5: memref<16x10xf32, #tpu.memory_space<vmem>>, %arg6: memref<1x10xf32, #tpu.memory_space<vmem>>, %arg7: memref<2x10xf32, #tpu.memory_space<vmem>>) attributes {dimension_semantics = [], scalar_prefetch = 0 : i64, scratch_operands = 0 : i64, tpu.core_type = #tpu.core_type<tc>} {
    %c0 = arith.constant 0 : index
    %c0_0 = arith.constant 0 : index
    %0 = vector.load %arg0[%c0, %c0_0] : memref<512x36xf32, #tpu.memory_space<vmem>>, vector<512x36xf32>
    %c0_1 = arith.constant 0 : index
    %c0_2 = arith.constant 0 : index
    %1 = vector.load %arg1[%c0_1, %c0_2] : memref<36x16xf32, #tpu.memory_space<vmem>>, vector<36x16xf32>
    %cst = arith.constant dense<0.000000e+00> : vector<512x16xf32>
    %2 = tpu.matmul %0, %1, %cst {dimension_numbers = #tpu.dot_dimension_numbers<[1], [0], [0], [1], [0, 0, 1, 1], [], []>} : vector<512x36xf32>, vector<36x16xf32>, vector<512x16xf32> -> vector<512x16xf32>
    %c0_3 = arith.constant 0 : index
    %c0_4 = arith.constant 0 : index
    %3 = vector.load %arg2[%c0_3, %c0_4] : memref<1x16xf32, #tpu.memory_space<vmem>>, vector<1x16xf32>
    %4 = vector.broadcast %3 : vector<1x16xf32> to vector<512x16xf32>
    %5 = arith.mulf %2, %4 : vector<512x16xf32>
    %c0_5 = arith.constant 0 : index
    %c0_6 = arith.constant 0 : index
    %6 = vector.load %arg3[%c0_5, %c0_6] : memref<1x16xf32, #tpu.memory_space<vmem>>, vector<1x16xf32>
    %7 = vector.broadcast %6 : vector<1x16xf32> to vector<512x16xf32>
    %8 = arith.addf %5, %7 : vector<512x16xf32>
    %c0_7 = arith.constant 0 : index
    %c0_8 = arith.constant 0 : index
    %9 = vector.load %arg4[%c0_7, %c0_8] : memref<2x512xf32, #tpu.memory_space<vmem>>, vector<2x512xf32>
    %cst_9 = arith.constant dense<0.000000e+00> : vector<2x16xf32>
    %10 = tpu.matmul %9, %8, %cst_9 {dimension_numbers = #tpu.dot_dimension_numbers<[1], [0], [0], [1], [0, 0, 1, 1], [], []>} : vector<2x512xf32>, vector<512x16xf32>, vector<2x16xf32> -> vector<2x16xf32>
    %c0_10 = arith.constant 0 : index
    %c0_11 = arith.constant 0 : index
    %11 = vector.load %arg5[%c0_10, %c0_11] : memref<16x10xf32, #tpu.memory_space<vmem>>, vector<16x10xf32>
    %cst_12 = arith.constant dense<0.000000e+00> : vector<2x10xf32>
    %12 = tpu.matmul %10, %11, %cst_12 {dimension_numbers = #tpu.dot_dimension_numbers<[1], [0], [0], [1], [0, 0, 1, 1], [], []>} : vector<2x16xf32>, vector<16x10xf32>, vector<2x10xf32> -> vector<2x10xf32>
    %c0_13 = arith.constant 0 : index
    %c0_14 = arith.constant 0 : index
    %13 = vector.load %arg6[%c0_13, %c0_14] : memref<1x10xf32, #tpu.memory_space<vmem>>, vector<1x10xf32>
    %14 = vector.broadcast %13 : vector<1x10xf32> to vector<2x10xf32>
    %15 = arith.addf %12, %14 : vector<2x10xf32>
    %c0_15 = arith.constant 0 : index
    %c0_16 = arith.constant 0 : index
    %16 = vector.load %arg7[%c0_15, %c0_16] : memref<2x10xf32, #tpu.memory_space<vmem>>, vector<2x10xf32>
    tpu.vector_store %arg7[%c0_15, %c0_16], %15 {strides = array<i32>} : memref<2x10xf32, #tpu.memory_space<vmem>>, vector<2x10xf32>,
    return
  }
}

</mosaic_0001>

<llo_original>
// kernel: bin_gate_net_forward.1
$region0: #{bin_gate_net_forward.1}
  #allocation0 [shape = 'u32[]', space=smem, size = 0x4, offset = 0x4, fixed_abs, tag = 'smem constant byte address 0x4 - core index']
  #allocation1 [shape = 'u32[144,128]{1,0:T(1,128)}', space=vmem, size = 0x12000, scoped, tag = 'internal scratch']
  %s0 = inlined_call_operand.vmem [shape: f32[512,36], index: 0, kind: input, shape index: {}]
  %s1 = inlined_call_operand.vmem [shape: f32[36,16], index: 1, kind: input, shape index: {}]
  %s2 = inlined_call_operand.vmem [shape: f32[1,16], index: 2, kind: input, shape index: {}]
  %s3 = inlined_call_operand.vmem [shape: f32[1,16], index: 3, kind: input, shape index: {}]
  %s4 = inlined_call_operand.vmem [shape: f32[2,512], index: 4, kind: input, shape index: {}]
  %s5 = inlined_call_operand.vmem [shape: f32[16,10], index: 5, kind: input, shape index: {}]
  %s6 = inlined_call_operand.vmem [shape: f32[1,10], index: 6, kind: input, shape index: {}]
  %s7 = inlined_call_operand.hbm [shape: f32[2,10], index: 7, kind: output, shape index: {}]
  %s8 = sld [smem:[#allocation0]]
  $region38: #{bin_gate_net_forward.1} parent=0
    _
  %s10 = ssub.s32 1, %s8
  %s11 = scalar_select 0, %s10, %s8
  $region1: #{bin_gate_net_forward.1} parent=0
    #allocation2 [shape = 'u8[1024]{0}', space=vmem, size = 0x400, scoped, tag = 'output window, operand 0, single buffered']
    #allocation3 [shape = 's32[1]{0}', space=sflag, size = 0x4, scoped, tag = 'scoped memory for bin_gate_net_forward.1']
    %12 = vsyncpa [#allocation3], 0
    // Predicated region
    $region2: #{bin_gate_net_forward.1} parent=1 // pred_check
      _
    $region3: #{bin_gate_net_forward.1} parent=1 // pred_check_branch
      %14 = sbr.rel (0) target = $region5
    $region4: #{bin_gate_net_forward.1} parent=1 // pred_region
      _
    $region5: #{bin_gate_net_forward.1} parent=1 // pred_fallthru
      _
    // Predicated region
    $region6: #{bin_gate_net_forward.1} parent=1 // pred_check
      _
    $region7: #{bin_gate_net_forward.1} parent=1 // pred_check_branch
      %16 = sbr.rel (0) target = $region9
    $region8: #{bin_gate_net_forward.1} parent=1 // pred_region
      _
    $region9: #{bin_gate_net_forward.1} parent=1 // pred_fallthru
      _
    // Predicated region
    $region10: #{bin_gate_net_forward.1} parent=1 // pred_check
      _
    $region11: #{bin_gate_net_forward.1} parent=1 // pred_check_branch
      %18 = sbr.rel (0) target = $region13
    $region12: #{bin_gate_net_forward.1} parent=1 // pred_region
      _
    $region13: #{bin_gate_net_forward.1} parent=1 // pred_fallthru
      _
    // Predicated region
    $region14: #{bin_gate_net_forward.1} parent=1 // pred_check
      _
    $region15: #{bin_gate_net_forward.1} parent=1 // pred_check_branch
      %20 = sbr.rel (0) target = $region17
    $region16: #{bin_gate_net_forward.1} parent=1 // pred_region
      _
    $region17: #{bin_gate_net_forward.1} parent=1 // pred_fallthru
      _
    // Predicated region
    $region18: #{bin_gate_net_forward.1} parent=1 // pred_check
      _
    $region19: #{bin_gate_net_forward.1} parent=1 // pred_check_branch
      %22 = sbr.rel (0) target = $region21
    $region20: #{bin_gate_net_forward.1} parent=1 // pred_region
      _
    $region21: #{bin_gate_net_forward.1} parent=1 // pred_fallthru
      _
    // Predicated region
    $region22: #{bin_gate_net_forward.1} parent=1 // pred_check
      _
    $region23: #{bin_gate_net_forward.1} parent=1 // pred_check_branch
      %24 = sbr.rel (0) target = $region25
    $region24: #{bin_gate_net_forward.1} parent=1 // pred_region
      _
    $region25: #{bin_gate_net_forward.1} parent=1 // pred_fallthru
      _
    // Predicated region
    $region26: #{bin_gate_net_forward.1} parent=1 // pred_check
      _
    $region27: #{bin_gate_net_forward.1} parent=1 // pred_check_branch
      %26 = sbr.rel (0) target = $region29
    $region28: #{bin_gate_net_forward.1} parent=1 // pred_region
      _
    $region29: #{bin_gate_net_forward.1} parent=1 // pred_fallthru
      _
    %v27 = vld [vmem:[%s0] sm:$0xff]
    %v28 = vld [vmem:[%s0 + $0x8] sm:$0xff]
    %v29 = vld [vmem:[%s0 + $0x10] sm:$0xff]
    %v30 = vld [vmem:[%s0 + $0x18] sm:$0xff]
    %v31 = vld [vmem:[%s0 + $0x20] sm:$0xff]
    %v32 = vld [vmem:[%s0 + $0x28] sm:$0xff]
    %v33 = vld [vmem:[%s0 + $0x30] sm:$0xff]
    %v34 = vld [vmem:[%s0 + $0x38] sm:$0xff]
    %v35 = vld [vmem:[%s0 + $0x40] sm:$0xff]
    %v36 = vld [vmem:[%s0 + $0x48] sm:$0xff]
    %v37 = vld [vmem:[%s0 + $0x50] sm:$0xff]
    %v38 = vld [vmem:[%s0 + $0x58] sm:$0xff]
    %v39 = vld [vmem:[%s0 + $0x60] sm:$0xff]
    %v40 = vld [vmem:[%s0 + $0x68] sm:$0xff]
    %v41 = vld [vmem:[%s0 + $0x70] sm:$0xff]
    %v42 = vld [vmem:[%s0 + $0x78] sm:$0xff]
    %v43 = vld [vmem:[%s0 + $0x80] sm:$0xff]
    %v44 = vld [vmem:[%s0 + $0x88] sm:$0xff]
    %v45 = vld [vmem:[%s0 + $0x90] sm:$0xff]
    %v46 = vld [vmem:[%s0 + $0x98] sm:$0xff]
    %v47 = vld [vmem:[%s0 + $0xa0] sm:$0xff]
    %v48 = vld [vmem:[%s0 + $0xa8] sm:$0xff]
    %v49 = vld [vmem:[%s0 + $0xb0] sm:$0xff]
    %v50 = vld [vmem:[%s0 + $0xb8] sm:$0xff]
    %v51 = vld [vmem:[%s0 + $0xc0] sm:$0xff]
    %v52 = vld [vmem:[%s0 + $0xc8] sm:$0xff]
    %v53 = vld [vmem:[%s0 + $0xd0] sm:$0xff]
    %v54 = vld [vmem:[%s0 + $0xd8] sm:$0xff]
    %v55 = vld [vmem:[%s0 + $0xe0] sm:$0xff]
    %v56 = vld [vmem:[%s0 + $0xe8] sm:$0xff]
    %v57 = vld [vmem:[%s0 + $0xf0] sm:$0xff]
    %v58 = vld [vmem:[%s0 + $0xf8] sm:$0xff]
    %v59 = vld [vmem:[%s0 + $0x100] sm:$0xff]
    %v60 = vld [vmem:[%s0 + $0x108] sm:$0xff]
    %v61 = vld [vmem:[%s0 + $0x110] sm:$0xff]
    %v62 = vld [vmem:[%s0 + $0x118] sm:$0xff]
    %v63 = vld [vmem:[%s0 + $0x120] sm:$0xff]
    %v64 = vld [vmem:[%s0 + $0x128] sm:$0xff]
    %v65 = vld [vmem:[%s0 + $0x130] sm:$0xff]
    %v66 = vld [vmem:[%s0 + $0x138] sm:$0xff]
    %v67 = vld [vmem:[%s0 + $0x140] sm:$0xff]
    %v68 = vld [vmem:[%s0 + $0x148] sm:$0xff]
    %v69 = vld [vmem:[%s0 + $0x150] sm:$0xff]
    %v70 = vld [vmem:[%s0 + $0x158] sm:$0xff]
    %v71 = vld [vmem:[%s0 + $0x160] sm:$0xff]
    %v72 = vld [vmem:[%s0 + $0x168] sm:$0xff]
    %v73 = vld [vmem:[%s0 + $0x170] sm:$0xff]
    %v74 = vld [vmem:[%s0 + $0x178] sm:$0xff]
    %v75 = vld [vmem:[%s0 + $0x180] sm:$0xff]
    %v76 = vld [vmem:[%s0 + $0x188] sm:$0xff]
    %v77 = vld [vmem:[%s0 + $0x190] sm:$0xff]
    %v78 = vld [vmem:[%s0 + $0x198] sm:$0xff]
    %v79 = vld [vmem:[%s0 + $0x1a0] sm:$0xff]
    %v80 = vld [vmem:[%s0 + $0x1a8] sm:$0xff]
    %v81 = vld [vmem:[%s0 + $0x1b0] sm:$0xff]
    %v82 = vld [vmem:[%s0 + $0x1b8] sm:$0xff]
    %v83 = vld [vmem:[%s0 + $0x1c0] sm:$0xff]
    %v84 = vld [vmem:[%s0 + $0x1c8] sm:$0xff]
    %v85 = vld [vmem:[%s0 + $0x1d0] sm:$0xff]
    %v86 = vld [vmem:[%s0 + $0x1d8] sm:$0xff]
    %v87 = vld [vmem:[%s0 + $0x1e0] sm:$0xff]
    %v88 = vld [vmem:[%s0 + $0x1e8] sm:$0xff]
    %v89 = vld [vmem:[%s0 + $0x1f0] sm:$0xff]
    %v90 = vld [vmem:[%s0 + $0x1f8] sm:$0xff]
    %v91 = vld [vmem:[%s1] sm:$0xff]
    %v92 = vld [vmem:[%s1 + $0x8] sm:$0xff]
    %v93 = vld [vmem:[%s1 + $0x10] sm:$0xff]
    %v94 = vld [vmem:[%s1 + $0x18] sm:$0xff]
    %v95 = vld [vmem:[%s1 + $0x20] sm:$0xf]
    %vm96 = vcmask 293888
    %v98 = vsel %vm96, %v27, 0
    %v101 = vsel %vm96, %v28, 0
    %v104 = vsel %vm96, %v29, 0
    %v107 = vsel %vm96, %v30, 0
    %v110 = vsel %vm96, %v31, 0
    %v113 = vsel %vm96, %v32, 0
    %v116 = vsel %vm96, %v33, 0
    %v119 = vsel %vm96, %v34, 0
    %v122 = vsel %vm96, %v35, 0
    %v125 = vsel %vm96, %v36, 0
    %v128 = vsel %vm96, %v37, 0
    %v131 = vsel %vm96, %v38, 0
    %v134 = vsel %vm96, %v39, 0
    %v137 = vsel %vm96, %v40, 0
    %v140 = vsel %vm96, %v41, 0
    %v143 = vsel %vm96, %v42, 0
    %v146 = vsel %vm96, %v43, 0
    %v149 = vsel %vm96, %v44, 0
    %v152 = vsel %vm96, %v45, 0
    %v155 = vsel %vm96, %v46, 0
    %v158 = vsel %vm96, %v47, 0
    %v161 = vsel %vm96, %v48, 0
    %v164 = vsel %vm96, %v49, 0
    %v167 = vsel %vm96, %v50, 0
    %v170 = vsel %vm96, %v51, 0
    %v173 = vsel %vm96, %v52, 0
    %v176 = vsel %vm96, %v53, 0
    %v179 = vsel %vm96, %v54, 0
    %v182 = vsel %vm96, %v55, 0
    %v185 = vsel %vm96, %v56, 0
    %v188 = vsel %vm96, %v57, 0
    %v191 = vsel %vm96, %v58, 0
    %v194 = vsel %vm96, %v59, 0
    %v197 = vsel %vm96, %v60, 0
    %v200 = vsel %vm96, %v61, 0
    %v203 = vsel %vm96, %v62, 0
    %v206 = vsel %vm96, %v63, 0
    %v209 = vsel %vm96, %v64, 0
    %v212 = vsel %vm96, %v65, 0
    %v215 = vsel %vm96, %v66, 0
    %v218 = vsel %vm96, %v67, 0
    %v221 = vsel %vm96, %v68, 0
    %v224 = vsel %vm96, %v69, 0
    %v227 = vsel %vm96, %v70, 0
    %v230 = vsel %vm96, %v71, 0
    %v233 = vsel %vm96, %v72, 0
    %v236 = vsel %vm96, %v73, 0
    %v239 = vsel %vm96, %v74, 0
    %v242 = vsel %vm96, %v75, 0
    %v245 = vsel %vm96, %v76, 0
    %v248 = vsel %vm96, %v77, 0
    %v251 = vsel %vm96, %v78, 0
    %v254 = vsel %vm96, %v79, 0
    %v257 = vsel %vm96, %v80, 0
    %v260 = vsel %vm96, %v81, 0
    %v263 = vsel %vm96, %v82, 0
    %v266 = vsel %vm96, %v83, 0
    %v269 = vsel %vm96, %v84, 0
    %v272 = vsel %vm96, %v85, 0
    %v275 = vsel %vm96, %v86, 0
    %v278 = vsel %vm96, %v87, 0
    %v281 = vsel %vm96, %v88, 0
    %v284 = vsel %vm96, %v89, 0
    %v287 = vsel %vm96, %v90, 0
    %vm289 = vcmask 1043456
    %v291 = vsel %vm289, %v95, 0
    %293 = vmatprep.subr.mxu0 0.0
    %294 = vmatpush1.msra.mxu0 %v91
    %295 = vmatprep.subr.mxu0 0.0
    %296 = vmatpush1.msra.mxu0 %v92
    %297 = vmatprep.subr.mxu0 0.0
    %298 = vmatpush1.msra.mxu0 %v93
    %299 = vmatprep.subr.mxu0 0.0
    %300 = vmatpush1.msra.mxu0 %v94
    %301 = vmatprep.subr.mxu0 0.0
    %302 = vmatpush1.msra.mxu0 %v291
    %303 = vmatprep.subr.mxu0 0.0
    %304 = vmatpush1.msra.mxu0 0.0
    %305 = vmatprep.subr.mxu0 0.0
    %306 = vmatpush1.msra.mxu0 0.0
    %307 = vmatprep.subr.mxu0 0.0
    %308 = vmatpush1.msra.mxu0 0.0
    %309 = vmatprep.subr.mxu0 0.0
    %310 = vmatpush1.msra.mxu0 0.0
    %311 = vmatprep.subr.mxu0 0.0
    %312 = vmatpush1.msra.mxu0 0.0
    %313 = vmatprep.subr.mxu0 0.0
    %314 = vmatpush1.msra.mxu0 0.0
    %315 = vmatprep.subr.mxu0 0.0
    %316 = vmatpush1.msra.mxu0 0.0
    %317 = vmatprep.subr.mxu0 0.0
    %318 = vmatpush1.msra.mxu0 0.0
    %319 = vmatprep.subr.mxu0 0.0
    %320 = vmatpush1.msra.mxu0 0.0
    %321 = vmatprep.subr.mxu0 0.0
    %322 = vmatpush1.msra.mxu0 0.0
    %323 = vmatprep.subr.mxu0 0.0
    %324 = vmatpush1.msra.mxu0 0.0
    %325 = vmatprep.subr.mxu0 0.0
    %326 = vmatpush1.msra.mxu0 0.0
    %327 = vmatprep.subr.mxu0 0.0
    %328 = vmatpush1.msra.mxu0 0.0
    %329 = vmatprep.subr.mxu0 0.0
    %330 = vmatpush1.msra.mxu0 0.0
    %331 = vmatprep.subr.mxu0 0.0
    %332 = vmatpush1.msra.mxu0 0.0
    %333 = vmatprep.subr.mxu0 0.0
    %334 = vmatpush1.msra.mxu0 0.0
    %335 = vmatprep.subr.mxu0 0.0
    %336 = vmatpush1.msra.mxu0 0.0
    %337 = vmatprep.subr.mxu0 0.0
    %338 = vmatpush1.msra.mxu0 0.0
    %339 = vmatprep.subr.mxu0 0.0
    %340 = vmatpush1.msra.mxu0 0.0
    %341 = vmatprep.subr.mxu0 0.0
    %342 = vmatpush1.msra.mxu0 0.0
    %343 = vmatprep.subr.mxu0 0.0
    %344 = vmatpush1.msra.mxu0 0.0
    %345 = vmatprep.subr.mxu0 0.0
    %346 = vmatpush1.msra.mxu0 0.0
    %347 = vmatprep.subr.mxu0 0.0
    %348 = vmatpush1.msra.mxu0 0.0
    %349 = vmatprep.subr.mxu0 0.0
    %350 = vmatpush1.msra.mxu0 0.0
    %351 = vmatprep.subr.mxu0 0.0
    %352 = vmatpush1.msra.mxu0 0.0
    %353 = vmatprep.subr.mxu0 0.0
    %354 = vmatpush1.msra.mxu0 0.0
    %355 = vmatprep.subr.mxu0 0.0
    %356 = vmatpush1.msra.mxu0 0.0
    %357 = vmatprep.mubr.f32.mxu0 0.0
    %358 = vmatmul.mubr.f32.gmra.mrb[0].mxu0 %v98
    %v359 = vpop.f32.mrb[0].mxu0
    %v360 = vadd.f32 0.0, %v359
    %v361 = vpop.f32.mrb[0].mxu0
    %362 = vmatprep.mubr.f32.mxu0 0.0
    %363 = vmatmul.mubr.f32.gmra.mrb[0].mxu0 %v101
    %v364 = vpop.f32.mrb[0].mxu0
    %v365 = vadd.f32 0.0, %v364
    %v366 = vpop.f32.mrb[0].mxu0
    %367 = vmatprep.mubr.f32.mxu0 0.0
    %368 = vmatmul.mubr.f32.gmra.mrb[0].mxu0 %v104
    %v369 = vpop.f32.mrb[0].mxu0
    %v370 = vadd.f32 0.0, %v369
    %v371 = vpop.f32.mrb[0].mxu0
    %372 = vmatprep.mubr.f32.mxu0 0.0
    %373 = vmatmul.mubr.f32.gmra.mrb[0].mxu0 %v107
    %v374 = vpop.f32.mrb[0].mxu0
    %v375 = vadd.f32 0.0, %v374
    %v376 = vpop.f32.mrb[0].mxu0
    %377 = vmatprep.mubr.f32.mxu0 0.0
    %378 = vmatmul.mubr.f32.gmra.mrb[0].mxu0 %v110
    %v379 = vpop.f32.mrb[0].mxu0
    %v380 = vadd.f32 0.0, %v379
    %v381 = vpop.f32.mrb[0].mxu0
    %382 = vmatprep.mubr.f32.mxu0 0.0
    %383 = vmatmul.mubr.f32.gmra.mrb[0].mxu0 %v113
    %v384 = vpop.f32.mrb[0].mxu0
    %v385 = vadd.f32 0.0, %v384
    %v386 = vpop.f32.mrb[0].mxu0
    %387 = vmatprep.mubr.f32.mxu0 0.0
    %388 = vmatmul.mubr.f32.gmra.mrb[0].mxu0 %v116
    %v389 = vpop.f32.mrb[0].mxu0
    %v390 = vadd.f32 0.0, %v389
    %v391 = vpop.f32.mrb[0].mxu0
    %392 = vmatprep.mubr.f32.mxu0 0.0
    %393 = vmatmul.mubr.f32.gmra.mrb[0].mxu0 %v119
    %v394 = vpop.f32.mrb[0].mxu0
    %v395 = vadd.f32 0.0, %v394
    %v396 = vpop.f32.mrb[0].mxu0
    %397 = vmatprep.mubr.f32.mxu0 0.0
    %398 = vmatmul.mubr.f32.gmra.mrb[0].mxu0 %v122
    %v399 = vpop.f32.mrb[0].mxu0
    %v400 = vadd.f32 0.0, %v399
    %v401 = vpop.f32.mrb[0].mxu0
    %402 = vmatprep.mubr.f32.mxu0 0.0
    %403 = vmatmul.mubr.f32.gmra.mrb[0].mxu0 %v125
    %v404 = vpop.f32.mrb[0].mxu0
    %v405 = vadd.f32 0.0, %v404
    %v406 = vpop.f32.mrb[0].mxu0
    %407 = vmatprep.mubr.f32.mxu0 0.0
    %408 = vmatmul.mubr.f32.gmra.mrb[0].mxu0 %v128
    %v409 = vpop.f32.mrb[0].mxu0
    %v410 = vadd.f32 0.0, %v409
    %v411 = vpop.f32.mrb[0].mxu0
    %412 = vmatprep.mubr.f32.mxu0 0.0
    %413 = vmatmul.mubr.f32.gmra.mrb[0].mxu0 %v131
    %v414 = vpop.f32.mrb[0].mxu0
    %v415 = vadd.f32 0.0, %v414
    %v416 = vpop.f32.mrb[0].mxu0
    %417 = vmatprep.mubr.f32.mxu0 0.0
    %418 = vmatmul.mubr.f32.gmra.mrb[0].mxu0 %v134
    %v419 = vpop.f32.mrb[0].mxu0
    %v420 = vadd.f32 0.0, %v419
    %v421 = vpop.f32.mrb[0].mxu0
    %422 = vmatprep.mubr.f32.mxu0 0.0
    %423 = vmatmul.mubr.f32.gmra.mrb[0].mxu0 %v137
    %v424 = vpop.f32.mrb[0].mxu0
    %v425 = vadd.f32 0.0, %v424
    %v426 = vpop.f32.mrb[0].mxu0
    %427 = vmatprep.mubr.f32.mxu0 0.0
    %428 = vmatmul.mubr.f32.gmra.mrb[0].mxu0 %v140
    %v429 = vpop.f32.mrb[0].mxu0
    %v430 = vadd.f32 0.0, %v429
    %v431 = vpop.f32.mrb[0].mxu0
    %432 = vmatprep.mubr.f32.mxu0 0.0
    %433 = vmatmul.mubr.f32.gmra.mrb[0].mxu0 %v143
    %v434 = vpop.f32.mrb[0].mxu0
    %v435 = vadd.f32 0.0, %v434
    %v436 = vpop.f32.mrb[0].mxu0
    %437 = vmatprep.mubr.f32.mxu0 0.0
    %438 = vmatmul.mubr.f32.gmra.mrb[0].mxu0 %v146
    %v439 = vpop.f32.mrb[0].mxu0
    %v440 = vadd.f32 0.0, %v439
    %v441 = vpop.f32.mrb[0].mxu0
    %442 = vmatprep.mubr.f32.mxu0 0.0
    %443 = vmatmul.mubr.f32.gmra.mrb[0].mxu0 %v149
    %v444 = vpop.f32.mrb[0].mxu0
    %v445 = vadd.f32 0.0, %v444
    %v446 = vpop.f32.mrb[0].mxu0
    %447 = vmatprep.mubr.f32.mxu0 0.0
    %448 = vmatmul.mubr.f32.gmra.mrb[0].mxu0 %v152
    %v449 = vpop.f32.mrb[0].mxu0
    %v450 = vadd.f32 0.0, %v449
    %v451 = vpop.f32.mrb[0].mxu0
    %452 = vmatprep.mubr.f32.mxu0 0.0
    %453 = vmatmul.mubr.f32.gmra.mrb[0].mxu0 %v155
    %v454 = vpop.f32.mrb[0].mxu0
    %v455 = vadd.f32 0.0, %v454
    %v456 = vpop.f32.mrb[0].mxu0
    %457 = vmatprep.mubr.f32.mxu0 0.0
    %458 = vmatmul.mubr.f32.gmra.mrb[0].mxu0 %v158
    %v459 = vpop.f32.mrb[0].mxu0
    %v460 = vadd.f32 0.0, %v459
    %v461 = vpop.f32.mrb[0].mxu0
    %462 = vmatprep.mubr.f32.mxu0 0.0
    %463 = vmatmul.mubr.f32.gmra.mrb[0].mxu0 %v161
    %v464 = vpop.f32.mrb[0].mxu0
    %v465 = vadd.f32 0.0, %v464
    %v466 = vpop.f32.mrb[0].mxu0
    %467 = vmatprep.mubr.f32.mxu0 0.0
    %468 = vmatmul.mubr.f32.gmra.mrb[0].mxu0 %v164
    %v469 = vpop.f32.mrb[0].mxu0
    %v470 = vadd.f32 0.0, %v469
    %v471 = vpop.f32.mrb[0].mxu0
    %472 = vmatprep.mubr.f32.mxu0 0.0
    %473 = vmatmul.mubr.f32.gmra.mrb[0].mxu0 %v167
    %v474 = vpop.f32.mrb[0].mxu0
    %v475 = vadd.f32 0.0, %v474
    %v476 = vpop.f32.mrb[0].mxu0
    %477 = vmatprep.mubr.f32.mxu0 0.0
    %478 = vmatmul.mubr.f32.gmra.mrb[0].mxu0 %v170
    %v479 = vpop.f32.mrb[0].mxu0
    %v480 = vadd.f32 0.0, %v479
    %v481 = vpop.f32.mrb[0].mxu0
    %482 = vmatprep.mubr.f32.mxu0 0.0
    %483 = vmatmul.mubr.f32.gmra.mrb[0].mxu0 %v173
    %v484 = vpop.f32.mrb[0].mxu0
    %v485 = vadd.f32 0.0, %v484
    %v486 = vpop.f32.mrb[0].mxu0
    %487 = vmatprep.mubr.f32.mxu0 0.0
    %488 = vmatmul.mubr.f32.gmra.mrb[0].mxu0 %v176
    %v489 = vpop.f32.mrb[0].mxu0
    %v490 = vadd.f32 0.0, %v489
    %v491 = vpop.f32.mrb[0].mxu0
    %492 = vmatprep.mubr.f32.mxu0 0.0
    %493 = vmatmul.mubr.f32.gmra.mrb[0].mxu0 %v179
    %v494 = vpop.f32.mrb[0].mxu0
    %v495 = vadd.f32 0.0, %v494
    %v496 = vpop.f32.mrb[0].mxu0
    %497 = vmatprep.mubr.f32.mxu0 0.0
    %498 = vmatmul.mubr.f32.gmra.mrb[0].mxu0 %v182
    %v499 = vpop.f32.mrb[0].mxu0
    %v500 = vadd.f32 0.0, %v499
    %v501 = vpop.f32.mrb[0].mxu0
    %502 = vmatprep.mubr.f32.mxu0 0.0
    %503 = vmatmul.mubr.f32.gmra.mrb[0].mxu0 %v185
    %v504 = vpop.f32.mrb[0].mxu0
    %v505 = vadd.f32 0.0, %v504
    %v506 = vpop.f32.mrb[0].mxu0
    %507 = vmatprep.mubr.f32.mxu0 0.0
    %508 = vmatmul.mubr.f32.gmra.mrb[0].mxu0 %v188
    %v509 = vpop.f32.mrb[0].mxu0
    %v510 = vadd.f32 0.0, %v509
    %v511 = vpop.f32.mrb[0].mxu0
    %512 = vmatprep.mubr.f32.mxu0 0.0
    %513 = vmatmul.mubr.f32.gmra.mrb[0].mxu0 %v191
    %v514 = vpop.f32.mrb[0].mxu0
    %v515 = vadd.f32 0.0, %v514
    %v516 = vpop.f32.mrb[0].mxu0
    %517 = vmatprep.mubr.f32.mxu0 0.0
    %518 = vmatmul.mubr.f32.gmra.mrb[0].mxu0 %v194
    %v519 = vpop.f32.mrb[0].mxu0
    %v520 = vadd.f32 0.0, %v519
    %v521 = vpop.f32.mrb[0].mxu0
    %522 = vmatprep.mubr.f32.mxu0 0.0
    %523 = vmatmul.mubr.f32.gmra.mrb[0].mxu0 %v197
    %v524 = vpop.f32.mrb[0].mxu0
    %v525 = vadd.f32 0.0, %v524
    %v526 = vpop.f32.mrb[0].mxu0
    %527 = vmatprep.mubr.f32.mxu0 0.0
    %528 = vmatmul.mubr.f32.gmra.mrb[0].mxu0 %v200
    %v529 = vpop.f32.mrb[0].mxu0
    %v530 = vadd.f32 0.0, %v529
    %v531 = vpop.f32.mrb[0].mxu0
    %532 = vmatprep.mubr.f32.mxu0 0.0
    %533 = vmatmul.mubr.f32.gmra.mrb[0].mxu0 %v203
    %v534 = vpop.f32.mrb[0].mxu0
    %v535 = vadd.f32 0.0, %v534
    %v536 = vpop.f32.mrb[0].mxu0
    %537 = vmatprep.mubr.f32.mxu0 0.0
    %538 = vmatmul.mubr.f32.gmra.mrb[0].mxu0 %v206
    %v539 = vpop.f32.mrb[0].mxu0
    %v540 = vadd.f32 0.0, %v539
    %v541 = vpop.f32.mrb[0].mxu0
    %542 = vmatprep.mubr.f32.mxu0 0.0
    %543 = vmatmul.mubr.f32.gmra.mrb[0].mxu0 %v209
    %v544 = vpop.f32.mrb[0].mxu0
    %v545 = vadd.f32 0.0, %v544
    %v546 = vpop.f32.mrb[0].mxu0
    %547 = vmatprep.mubr.f32.mxu0 0.0
    %548 = vmatmul.mubr.f32.gmra.mrb[0].mxu0 %v212
    %v549 = vpop.f32.mrb[0].mxu0
    %v550 = vadd.f32 0.0, %v549
    %v551 = vpop.f32.mrb[0].mxu0
    %552 = vmatprep.mubr.f32.mxu0 0.0
    %553 = vmatmul.mubr.f32.gmra.mrb[0].mxu0 %v215
    %v554 = vpop.f32.mrb[0].mxu0
    %v555 = vadd.f32 0.0, %v554
    %v556 = vpop.f32.mrb[0].mxu0
    %557 = vmatprep.mubr.f32.mxu0 0.0
    %558 = vmatmul.mubr.f32.gmra.mrb[0].mxu0 %v218
    %v559 = vpop.f32.mrb[0].mxu0
    %v560 = vadd.f32 0.0, %v559
    %v561 = vpop.f32.mrb[0].mxu0
    %562 = vmatprep.mubr.f32.mxu0 0.0
    %563 = vmatmul.mubr.f32.gmra.mrb[0].mxu0 %v221
    %v564 = vpop.f32.mrb[0].mxu0
    %v565 = vadd.f32 0.0, %v564
    %v566 = vpop.f32.mrb[0].mxu0
    %567 = vmatprep.mubr.f32.mxu0 0.0
    %568 = vmatmul.mubr.f32.gmra.mrb[0].mxu0 %v224
    %v569 = vpop.f32.mrb[0].mxu0
    %v570 = vadd.f32 0.0, %v569
    %v571 = vpop.f32.mrb[0].mxu0
    %572 = vmatprep.mubr.f32.mxu0 0.0
    %573 = vmatmul.mubr.f32.gmra.mrb[0].mxu0 %v227
    %v574 = vpop.f32.mrb[0].mxu0
    %v575 = vadd.f32 0.0, %v574
    %v576 = vpop.f32.mrb[0].mxu0
    %577 = vmatprep.mubr.f32.mxu0 0.0
    %578 = vmatmul.mubr.f32.gmra.mrb[0].mxu0 %v230
    %v579 = vpop.f32.mrb[0].mxu0
    %v580 = vadd.f32 0.0, %v579
    %v581 = vpop.f32.mrb[0].mxu0
    %582 = vmatprep.mubr.f32.mxu0 0.0
    %583 = vmatmul.mubr.f32.gmra.mrb[0].mxu0 %v233
    %v584 = vpop.f32.mrb[0].mxu0
    %v585 = vadd.f32 0.0, %v584
    %v586 = vpop.f32.mrb[0].mxu0
    %587 = vmatprep.mubr.f32.mxu0 0.0
    %588 = vmatmul.mubr.f32.gmra.mrb[0].mxu0 %v236
    %v589 = vpop.f32.mrb[0].mxu0
    %v590 = vadd.f32 0.0, %v589
    %v591 = vpop.f32.mrb[0].mxu0
    %592 = vmatprep.mubr.f32.mxu0 0.0
    %593 = vmatmul.mubr.f32.gmra.mrb[0].mxu0 %v239
    %v594 = vpop.f32.mrb[0].mxu0
    %v595 = vadd.f32 0.0, %v594
    %v596 = vpop.f32.mrb[0].mxu0
    %597 = vmatprep.mubr.f32.mxu0 0.0
    %598 = vmatmul.mubr.f32.gmra.mrb[0].mxu0 %v242
    %v599 = vpop.f32.mrb[0].mxu0
    %v600 = vadd.f32 0.0, %v599
    %v601 = vpop.f32.mrb[0].mxu0
    %602 = vmatprep.mubr.f32.mxu0 0.0
    %603 = vmatmul.mubr.f32.gmra.mrb[0].mxu0 %v245
    %v604 = vpop.f32.mrb[0].mxu0
    %v605 = vadd.f32 0.0, %v604
    %v606 = vpop.f32.mrb[0].mxu0
    %607 = vmatprep.mubr.f32.mxu0 0.0
    %608 = vmatmul.mubr.f32.gmra.mrb[0].mxu0 %v248
    %v609 = vpop.f32.mrb[0].mxu0
    %v610 = vadd.f32 0.0, %v609
    %v611 = vpop.f32.mrb[0].mxu0
    %612 = vmatprep.mubr.f32.mxu0 0.0
    %613 = vmatmul.mubr.f32.gmra.mrb[0].mxu0 %v251
    %v614 = vpop.f32.mrb[0].mxu0
    %v615 = vadd.f32 0.0, %v614
    %v616 = vpop.f32.mrb[0].mxu0
    %617 = vmatprep.mubr.f32.mxu0 0.0
    %618 = vmatmul.mubr.f32.gmra.mrb[0].mxu0 %v254
    %v619 = vpop.f32.mrb[0].mxu0
    %v620 = vadd.f32 0.0, %v619
    %v621 = vpop.f32.mrb[0].mxu0
    %622 = vmatprep.mubr.f32.mxu0 0.0
    %623 = vmatmul.mubr.f32.gmra.mrb[0].mxu0 %v257
    %v624 = vpop.f32.mrb[0].mxu0
    %v625 = vadd.f32 0.0, %v624
    %v626 = vpop.f32.mrb[0].mxu0
    %627 = vmatprep.mubr.f32.mxu0 0.0
    %628 = vmatmul.mubr.f32.gmra.mrb[0].mxu0 %v260
    %v629 = vpop.f32.mrb[0].mxu0
    %v630 = vadd.f32 0.0, %v629
    %v631 = vpop.f32.mrb[0].mxu0
    %632 = vmatprep.mubr.f32.mxu0 0.0
    %633 = vmatmul.mubr.f32.gmra.mrb[0].mxu0 %v263
    %v634 = vpop.f32.mrb[0].mxu0
    %v635 = vadd.f32 0.0, %v634
    %v636 = vpop.f32.mrb[0].mxu0
    %637 = vmatprep.mubr.f32.mxu0 0.0
    %638 = vmatmul.mubr.f32.gmra.mrb[0].mxu0 %v266
    %v639 = vpop.f32.mrb[0].mxu0
    %v640 = vadd.f32 0.0, %v639
    %v641 = vpop.f32.mrb[0].mxu0
    %642 = vmatprep.mubr.f32.mxu0 0.0
    %643 = vmatmul.mubr.f32.gmra.mrb[0].mxu0 %v269
    %v644 = vpop.f32.mrb[0].mxu0
    %v645 = vadd.f32 0.0, %v644
    %v646 = vpop.f32.mrb[0].mxu0
    %647 = vmatprep.mubr.f32.mxu0 0.0
    %648 = vmatmul.mubr.f32.gmra.mrb[0].mxu0 %v272
    %v649 = vpop.f32.mrb[0].mxu0
    %v650 = vadd.f32 0.0, %v649
    %v651 = vpop.f32.mrb[0].mxu0
    %652 = vmatprep.mubr.f32.mxu0 0.0
    %653 = vmatmul.mubr.f32.gmra.mrb[0].mxu0 %v275
    %v654 = vpop.f32.mrb[0].mxu0
    %v655 = vadd.f32 0.0, %v654
    %v656 = vpop.f32.mrb[0].mxu0
    %657 = vmatprep.mubr.f32.mxu0 0.0
    %658 = vmatmul.mubr.f32.gmra.mrb[0].mxu0 %v278
    %v659 = vpop.f32.mrb[0].mxu0
    %v660 = vadd.f32 0.0, %v659
    %v661 = vpop.f32.mrb[0].mxu0
    %662 = vmatprep.mubr.f32.mxu0 0.0
    %663 = vmatmul.mubr.f32.gmra.mrb[0].mxu0 %v281
    %v664 = vpop.f32.mrb[0].mxu0
    %v665 = vadd.f32 0.0, %v664
    %v666 = vpop.f32.mrb[0].mxu0
    %667 = vmatprep.mubr.f32.mxu0 0.0
    %668 = vmatmul.mubr.f32.gmra.mrb[0].mxu0 %v284
    %v669 = vpop.f32.mrb[0].mxu0
    %v670 = vadd.f32 0.0, %v669
    %v671 = vpop.f32.mrb[0].mxu0
    %672 = vmatprep.mubr.f32.mxu0 0.0
    %673 = vmatmul.mubr.f32.gmra.mrb[0].mxu0 %v287
    %v674 = vpop.f32.mrb[0].mxu0
    %v675 = vadd.f32 0.0, %v674
    %v676 = vpop.f32.mrb[0].mxu0
    %677 = vdwg.mxu0
    %v678 = vld [vmem:[%s2] sm:$0x1]
    %v680 = vlaneseq
    %v681 = vshrl.u32 %v680, 7
    %v682 = vsub.s32 0, %v681
    %v683 = vrot.slane %v678, %v682
    %v685 = vmul.f32 %v360, %v683
    %v686 = vmul.f32 %v365, %v683
    %v687 = vmul.f32 %v370, %v683
    %v688 = vmul.f32 %v375, %v683
    %v689 = vmul.f32 %v380, %v683
    %v690 = vmul.f32 %v385, %v683
    %v691 = vmul.f32 %v390, %v683
    %v692 = vmul.f32 %v395, %v683
    %v693 = vmul.f32 %v400, %v683
    %v694 = vmul.f32 %v405, %v683
    %v695 = vmul.f32 %v410, %v683
    %v696 = vmul.f32 %v415, %v683
    %v697 = vmul.f32 %v420, %v683
    %v698 = vmul.f32 %v425, %v683
    %v699 = vmul.f32 %v430, %v683
    %v700 = vmul.f32 %v435, %v683
    %v701 = vmul.f32 %v440, %v683
    %v702 = vmul.f32 %v445, %v683
    %v703 = vmul.f32 %v450, %v683
    %v704 = vmul.f32 %v455, %v683
    %v705 = vmul.f32 %v460, %v683
    %v706 = vmul.f32 %v465, %v683
    %v707 = vmul.f32 %v470, %v683
    %v708 = vmul.f32 %v475, %v683
    %v709 = vmul.f32 %v480, %v683
    %v710 = vmul.f32 %v485, %v683
    %v711 = vmul.f32 %v490, %v683
    %v712 = vmul.f32 %v495, %v683
    %v713 = vmul.f32 %v500, %v683
    %v714 = vmul.f32 %v505, %v683
    %v715 = vmul.f32 %v510, %v683
    %v716 = vmul.f32 %v515, %v683
    %v717 = vmul.f32 %v520, %v683
    %v718 = vmul.f32 %v525, %v683
    %v719 = vmul.f32 %v530, %v683
    %v720 = vmul.f32 %v535, %v683
    %v721 = vmul.f32 %v540, %v683
    %v722 = vmul.f32 %v545, %v683
    %v723 = vmul.f32 %v550, %v683
    %v724 = vmul.f32 %v555, %v683
    %v725 = vmul.f32 %v560, %v683
    %v726 = vmul.f32 %v565, %v683
    %v727 = vmul.f32 %v570, %v683
    %v728 = vmul.f32 %v575, %v683
    %v729 = vmul.f32 %v580, %v683
    %v730 = vmul.f32 %v585, %v683
    %v731 = vmul.f32 %v590, %v683
    %v732 = vmul.f32 %v595, %v683
    %v733 = vmul.f32 %v600, %v683
    %v734 = vmul.f32 %v605, %v683
    %v735 = vmul.f32 %v610, %v683
    %v736 = vmul.f32 %v615, %v683
    %v737 = vmul.f32 %v620, %v683
    %v738 = vmul.f32 %v625, %v683
    %v739 = vmul.f32 %v630, %v683
    %v740 = vmul.f32 %v635, %v683
    %v741 = vmul.f32 %v640, %v683
    %v742 = vmul.f32 %v645, %v683
    %v743 = vmul.f32 %v650, %v683
    %v744 = vmul.f32 %v655, %v683
    %v745 = vmul.f32 %v660, %v683
    %v746 = vmul.f32 %v665, %v683
    %v747 = vmul.f32 %v670, %v683
    %v748 = vmul.f32 %v675, %v683
    %v749 = vld [vmem:[%s3] sm:$0x1]
    %v751 = vlaneseq
    %v752 = vshrl.u32 %v751, 7
    %v753 = vsub.s32 0, %v752
    %v754 = vrot.slane %v749, %v753
    %v756 = vadd.f32 %v685, %v754
    %v757 = vadd.f32 %v686, %v754
    %v758 = vadd.f32 %v687, %v754
    %v759 = vadd.f32 %v688, %v754
    %v760 = vadd.f32 %v689, %v754
    %v761 = vadd.f32 %v690, %v754
    %v762 = vadd.f32 %v691, %v754
    %v763 = vadd.f32 %v692, %v754
    %v764 = vadd.f32 %v693, %v754
    %v765 = vadd.f32 %v694, %v754
    %v766 = vadd.f32 %v695, %v754
    %v767 = vadd.f32 %v696, %v754
    %v768 = vadd.f32 %v697, %v754
    %v769 = vadd.f32 %v698, %v754
    %v770 = vadd.f32 %v699, %v754
    %v771 = vadd.f32 %v700, %v754
    %v772 = vadd.f32 %v701, %v754
    %v773 = vadd.f32 %v702, %v754
    %v774 = vadd.f32 %v703, %v754
    %v775 = vadd.f32 %v704, %v754
    %v776 = vadd.f32 %v705, %v754
    %v777 = vadd.f32 %v706, %v754
    %v778 = vadd.f32 %v707, %v754
    %v779 = vadd.f32 %v708, %v754
    %v780 = vadd.f32 %v709, %v754
    %v781 = vadd.f32 %v710, %v754
    %v782 = vadd.f32 %v711, %v754
    %v783 = vadd.f32 %v712, %v754
    %v784 = vadd.f32 %v713, %v754
    %v785 = vadd.f32 %v714, %v754
    %v786 = vadd.f32 %v715, %v754
    %v787 = vadd.f32 %v716, %v754
    %v788 = vadd.f32 %v717, %v754
    %v789 = vadd.f32 %v718, %v754
    %v790 = vadd.f32 %v719, %v754
    %v791 = vadd.f32 %v720, %v754
    %v792 = vadd.f32 %v721, %v754
    %v793 = vadd.f32 %v722, %v754
    %v794 = vadd.f32 %v723, %v754
    %v795 = vadd.f32 %v724, %v754
    %v796 = vadd.f32 %v725, %v754
    %v797 = vadd.f32 %v726, %v754
    %v798 = vadd.f32 %v727, %v754
    %v799 = vadd.f32 %v728, %v754
    %v800 = vadd.f32 %v729, %v754
    %v801 = vadd.f32 %v730, %v754
    %v802 = vadd.f32 %v731, %v754
    %v803 = vadd.f32 %v732, %v754
    %v804 = vadd.f32 %v733, %v754
    %v805 = vadd.f32 %v734, %v754
    %v806 = vadd.f32 %v735, %v754
    %v807 = vadd.f32 %v736, %v754
    %v808 = vadd.f32 %v737, %v754
    %v809 = vadd.f32 %v738, %v754
    %v810 = vadd.f32 %v739, %v754
    %v811 = vadd.f32 %v740, %v754
    %v812 = vadd.f32 %v741, %v754
    %v813 = vadd.f32 %v742, %v754
    %v814 = vadd.f32 %v743, %v754
    %v815 = vadd.f32 %v744, %v754
    %v816 = vadd.f32 %v745, %v754
    %v817 = vadd.f32 %v746, %v754
    %v818 = vadd.f32 %v747, %v754
    %v819 = vadd.f32 %v748, %v754
    %v820 = vld [vmem:[%s4] sm:$0xff]
    %v822 = vcombine.high %v820, %v820
    %v824 = vunpack.c.l.s4 1983009808
    %v825 = vunpack.c.0.s8 %v824
    %v826 = vlaneseq
    %v827 = vshrl.u32 %v826, 7
    %v828 = vsub.s32 %v825, %v827
    %v829 = vrot.slane %v820, %v828
    %v831 = vunpack.c.l.s4 1983009808
    %v832 = vunpack.c.0.s8 %v831
    %v833 = vlaneseq
    %v834 = vshrl.u32 %v833, 7
    %v835 = vsub.s32 %v832, %v834
    %v836 = vrot.slane %v822, %v835
    %v837 = vcombine.high %v829, %v829
    %v838 = vcombine.high %v836, %v836
    %843 = vmatprep.subr.mxu0 0.0
    %844 = vmatpush1.msra.mxu0 %v756
    %845 = vmatprep.subr.mxu0 0.0
    %846 = vmatpush1.msra.mxu0 %v757
    %847 = vmatprep.subr.mxu0 0.0
    %848 = vmatpush1.msra.mxu0 %v758
    %849 = vmatprep.subr.mxu0 0.0
    %850 = vmatpush1.msra.mxu0 %v759
    %851 = vmatprep.subr.mxu0 0.0
    %852 = vmatpush1.msra.mxu0 %v760
    %853 = vmatprep.subr.mxu0 0.0
    %854 = vmatpush1.msra.mxu0 %v761
    %855 = vmatprep.subr.mxu0 0.0
    %856 = vmatpush1.msra.mxu0 %v762
    %857 = vmatprep.subr.mxu0 0.0
    %858 = vmatpush1.msra.mxu0 %v763
    %859 = vmatprep.subr.mxu0 0.0
    %860 = vmatpush1.msra.mxu0 %v764
    %861 = vmatprep.subr.mxu0 0.0
    %862 = vmatpush1.msra.mxu0 %v765
    %863 = vmatprep.subr.mxu0 0.0
    %864 = vmatpush1.msra.mxu0 %v766
    %865 = vmatprep.subr.mxu0 0.0
    %866 = vmatpush1.msra.mxu0 %v767
    %867 = vmatprep.subr.mxu0 0.0
    %868 = vmatpush1.msra.mxu0 %v768
    %869 = vmatprep.subr.mxu0 0.0
    %870 = vmatpush1.msra.mxu0 %v769
    %871 = vmatprep.subr.mxu0 0.0
    %872 = vmatpush1.msra.mxu0 %v770
    %873 = vmatprep.subr.mxu0 0.0
    %874 = vmatpush1.msra.mxu0 %v771
    %875 = vmatprep.subr.mxu0 0.0
    %876 = vmatpush1.msra.mxu0 %v772
    %877 = vmatprep.subr.mxu0 0.0
    %878 = vmatpush1.msra.mxu0 %v773
    %879 = vmatprep.subr.mxu0 0.0
    %880 = vmatpush1.msra.mxu0 %v774
    %881 = vmatprep.subr.mxu0 0.0
    %882 = vmatpush1.msra.mxu0 %v775
    %883 = vmatprep.subr.mxu0 0.0
    %884 = vmatpush1.msra.mxu0 %v776
    %885 = vmatprep.subr.mxu0 0.0
    %886 = vmatpush1.msra.mxu0 %v777
    %887 = vmatprep.subr.mxu0 0.0
    %888 = vmatpush1.msra.mxu0 %v778
    %889 = vmatprep.subr.mxu0 0.0
    %890 = vmatpush1.msra.mxu0 %v779
    %891 = vmatprep.subr.mxu0 0.0
    %892 = vmatpush1.msra.mxu0 %v780
    %893 = vmatprep.subr.mxu0 0.0
    %894 = vmatpush1.msra.mxu0 %v781
    %895 = vmatprep.subr.mxu0 0.0
    %896 = vmatpush1.msra.mxu0 %v782
    %897 = vmatprep.subr.mxu0 0.0
    %898 = vmatpush1.msra.mxu0 %v783
    %899 = vmatprep.subr.mxu0 0.0
    %900 = vmatpush1.msra.mxu0 %v784
    %901 = vmatprep.subr.mxu0 0.0
    %902 = vmatpush1.msra.mxu0 %v785
    %903 = vmatprep.subr.mxu0 0.0
    %904 = vmatpush1.msra.mxu0 %v786
    %905 = vmatprep.subr.mxu0 0.0
    %906 = vmatpush1.msra.mxu0 %v787
    %907 = vmatprep.mubr.f32.mxu0 %v837
    %908 = vmatmul.mubr.f32.gmra.mrb[0].mxu0 %v829
    %v909 = vpop.f32.mrb[0].mxu0
    %v910 = vadd.f32 0.0, %v909
    %v911 = vpop.f32.mrb[0].mxu0
    %912 = vdwg.mxu0
    %913 = vmatprep.subr.mxu0 0.0
    %914 = vmatpush1.msra.mxu0 %v788
    %915 = vmatprep.subr.mxu0 0.0
    %916 = vmatpush1.msra.mxu0 %v789
    %917 = vmatprep.subr.mxu0 0.0
    %918 = vmatpush1.msra.mxu0 %v790
    %919 = vmatprep.subr.mxu0 0.0
    %920 = vmatpush1.msra.mxu0 %v791
    %921 = vmatprep.subr.mxu0 0.0
    %922 = vmatpush1.msra.mxu0 %v792
    %923 = vmatprep.subr.mxu0 0.0
    %924 = vmatpush1.msra.mxu0 %v793
    %925 = vmatprep.subr.mxu0 0.0
    %926 = vmatpush1.msra.mxu0 %v794
    %927 = vmatprep.subr.mxu0 0.0
    %928 = vmatpush1.msra.mxu0 %v795
    %929 = vmatprep.subr.mxu0 0.0
    %930 = vmatpush1.msra.mxu0 %v796
    %931 = vmatprep.subr.mxu0 0.0
    %932 = vmatpush1.msra.mxu0 %v797
    %933 = vmatprep.subr.mxu0 0.0
    %934 = vmatpush1.msra.mxu0 %v798
    %935 = vmatprep.subr.mxu0 0.0
    %936 = vmatpush1.msra.mxu0 %v799
    %937 = vmatprep.subr.mxu0 0.0
    %938 = vmatpush1.msra.mxu0 %v800
    %939 = vmatprep.subr.mxu0 0.0
    %940 = vmatpush1.msra.mxu0 %v801
    %941 = vmatprep.subr.mxu0 0.0
    %942 = vmatpush1.msra.mxu0 %v802
    %943 = vmatprep.subr.mxu0 0.0
    %944 = vmatpush1.msra.mxu0 %v803
    %945 = vmatprep.subr.mxu0 0.0
    %946 = vmatpush1.msra.mxu0 %v804
    %947 = vmatprep.subr.mxu0 0.0
    %948 = vmatpush1.msra.mxu0 %v805
    %949 = vmatprep.subr.mxu0 0.0
    %950 = vmatpush1.msra.mxu0 %v806
    %951 = vmatprep.subr.mxu0 0.0
    %952 = vmatpush1.msra.mxu0 %v807
    %953 = vmatprep.subr.mxu0 0.0
    %954 = vmatpush1.msra.mxu0 %v808
    %955 = vmatprep.subr.mxu0 0.0
    %956 = vmatpush1.msra.mxu0 %v809
    %957 = vmatprep.subr.mxu0 0.0
    %958 = vmatpush1.msra.mxu0 %v810
    %959 = vmatprep.subr.mxu0 0.0
    %960 = vmatpush1.msra.mxu0 %v811
    %961 = vmatprep.subr.mxu0 0.0
    %962 = vmatpush1.msra.mxu0 %v812
    %963 = vmatprep.subr.mxu0 0.0
    %964 = vmatpush1.msra.mxu0 %v813
    %965 = vmatprep.subr.mxu0 0.0
    %966 = vmatpush1.msra.mxu0 %v814
    %967 = vmatprep.subr.mxu0 0.0
    %968 = vmatpush1.msra.mxu0 %v815
    %969 = vmatprep.subr.mxu0 0.0
    %970 = vmatpush1.msra.mxu0 %v816
    %971 = vmatprep.subr.mxu0 0.0
    %972 = vmatpush1.msra.mxu0 %v817
    %973 = vmatprep.subr.mxu0 0.0
    %974 = vmatpush1.msra.mxu0 %v818
    %975 = vmatprep.subr.mxu0 0.0
    %976 = vmatpush1.msra.mxu0 %v819
    %977 = vmatprep.mubr.f32.mxu0 %v838
    %978 = vmatmul.mubr.f32.gmra.mrb[0].mxu0 %v836
    %v979 = vpop.f32.mrb[0].mxu0
    %v980 = vadd.f32 %v910, %v979
    %v981 = vpop.f32.mrb[0].mxu0
    %982 = vdwg.mxu0
    %v983 = vld [vmem:[%s5] sm:$0xff]
    %v984 = vld [vmem:[%s5 + $0x8] sm:$0xff]
    %v985 = vld [vmem:[%s6] sm:$0x1]
    %v987 = vlaneseq
    %v988 = vshrl.u32 %v987, 7
    %v989 = vsub.s32 0, %v988
    %v990 = vrot.slane %v985, %v989
    %vm992 = vcmask 130048
    %v994 = vsel %vm992, %v980, 0
    %996 = vmatprep.subr.mxu0 0.0
    %997 = vmatpush1.msra.mxu0 %v983
    %998 = vmatprep.subr.mxu0 0.0
    %999 = vmatpush1.msra.mxu0 %v984
    %1000 = vmatprep.subr.mxu0 0.0
    %1001 = vmatpush1.msra.mxu0 0.0
    %1002 = vmatprep.subr.mxu0 0.0
    %1003 = vmatpush1.msra.mxu0 0.0
    %1004 = vmatprep.subr.mxu0 0.0
    %1005 = vmatpush1.msra.mxu0 0.0
    %1006 = vmatprep.subr.mxu0 0.0
    %1007 = vmatpush1.msra.mxu0 0.0
    %1008 = vmatprep.subr.mxu0 0.0
    %1009 = vmatpush1.msra.mxu0 0.0
    %1010 = vmatprep.subr.mxu0 0.0
    %1011 = vmatpush1.msra.mxu0 0.0
    %1012 = vmatprep.subr.mxu0 0.0
    %1013 = vmatpush1.msra.mxu0 0.0
    %1014 = vmatprep.subr.mxu0 0.0
    %1015 = vmatpush1.msra.mxu0 0.0
    %1016 = vmatprep.subr.mxu0 0.0
    %1017 = vmatpush1.msra.mxu0 0.0
    %1018 = vmatprep.subr.mxu0 0.0
    %1019 = vmatpush1.msra.mxu0 0.0
    %1020 = vmatprep.subr.mxu0 0.0
    %1021 = vmatpush1.msra.mxu0 0.0
    %1022 = vmatprep.subr.mxu0 0.0
    %1023 = vmatpush1.msra.mxu0 0.0
    %1024 = vmatprep.subr.mxu0 0.0
    %1025 = vmatpush1.msra.mxu0 0.0
    %1026 = vmatprep.subr.mxu0 0.0
    %1027 = vmatpush1.msra.mxu0 0.0
    %1028 = vmatprep.subr.mxu0 0.0
    %1029 = vmatpush1.msra.mxu0 0.0
    %1030 = vmatprep.subr.mxu0 0.0
    %1031 = vmatpush1.msra.mxu0 0.0
    %1032 = vmatprep.subr.mxu0 0.0
    %1033 = vmatpush1.msra.mxu0 0.0
    %1034 = vmatprep.subr.mxu0 0.0
    %1035 = vmatpush1.msra.mxu0 0.0
    %1036 = vmatprep.subr.mxu0 0.0
    %1037 = vmatpush1.msra.mxu0 0.0
    %1038 = vmatprep.subr.mxu0 0.0
    %1039 = vmatpush1.msra.mxu0 0.0
    %1040 = vmatprep.subr.mxu0 0.0
    %1041 = vmatpush1.msra.mxu0 0.0
    %1042 = vmatprep.subr.mxu0 0.0
    %1043 = vmatpush1.msra.mxu0 0.0
    %1044 = vmatprep.subr.mxu0 0.0
    %1045 = vmatpush1.msra.mxu0 0.0
    %1046 = vmatprep.subr.mxu0 0.0
    %1047 = vmatpush1.msra.mxu0 0.0
    %1048 = vmatprep.subr.mxu0 0.0
    %1049 = vmatpush1.msra.mxu0 0.0
    %1050 = vmatprep.subr.mxu0 0.0
    %1051 = vmatpush1.msra.mxu0 0.0
    %1052 = vmatprep.subr.mxu0 0.0
    %1053 = vmatpush1.msra.mxu0 0.0
    %1054 = vmatprep.subr.mxu0 0.0
    %1055 = vmatpush1.msra.mxu0 0.0
    %1056 = vmatprep.subr.mxu0 0.0
    %1057 = vmatpush1.msra.mxu0 0.0
    %1058 = vmatprep.subr.mxu0 0.0
    %1059 = vmatpush1.msra.mxu0 0.0
    %1060 = vmatprep.mubr.f32.mxu0 0.0
    %1061 = vmatmul.mubr.f32.gmra.mrb[0].mxu0 %v994
    %v1062 = vpop.f32.mrb[0].mxu0
    %v1063 = vadd.f32 %v990, %v1062
    %v1064 = vpop.f32.mrb[0].mxu0
    %1065 = vdwg.mxu0
    %vm1066 = vcmask 74752
    %1067 = vst.msk [vmem:[#allocation2] sm:$0x3] %vm1066, %v1063
    // Predicated region
    $region30: #{bin_gate_net_forward.1} parent=1 // pred_check
      _
    $region31: #{bin_gate_net_forward.1} parent=1 // pred_check_branch
      %1069 = sbr.rel (0) target = $region33
    $region32: #{bin_gate_net_forward.1} parent=1 // pred_region
      %s1071 = ssub.s32 32, 32
      %1072 = vsyncadd [#allocation3], %s1071
      %s1074 = sshll.u32 [#allocation2], 4
      %s1075 = int_to_ptr.vmem [resolvable:$true] %s1074
      %1077 = dma.vmem_to_hbm [thread:$0]  %s1075, 32, %s7, [#allocation3]
    $region33: #{bin_gate_net_forward.1} parent=1 // pred_fallthru
      _
    // Predicated region
    $region34: #{bin_gate_net_forward.1} parent=1 // pred_check
      _
    $region35: #{bin_gate_net_forward.1} parent=1 // pred_check_branch
      %1079 = sbr.rel (0) target = $region37
    $region36: #{bin_gate_net_forward.1} parent=1 // pred_region
      %1080 = dma.done [#allocation3], 32
    $region37: #{bin_gate_net_forward.1} parent=1 // pred_fallthru
      _
    %1081 = vsyncpa [#allocation3], 1

</llo_original>
